<compile_context>
chip_gen: v6e
topology: v6e:2x2x1
jax: 0.10.0
libtpu: 0.0.40
codegen_flags: <defaults>
</compile_context>

<pallas_src>
import math
import numpy as np
import jax
import jax.numpy as jnp
from jax import lax
from jax.experimental import pallas as pl
from jax.experimental.pallas import tpu as pltpu


# ----------------------------- helpers -------------------------------------

def _full_spec(shape):
    nd = len(shape)
    return pl.BlockSpec(shape, lambda *args, _nd=nd: (0,) * _nd)


def adaptive_pool_matrix(in_size, out_size):
    """Row-stochastic matrix P s.t. (P @ v) == AdaptiveAvgPool1d(out_size)(v)."""
    P = np.zeros((out_size, in_size), np.float32)
    for i in range(out_size):
        s = (i * in_size) // out_size
        e = math.ceil((i + 1) * in_size / out_size)
        P[i, s:e] = 1.0 / (e - s)
    return P


# --------------------------- Pallas kernels ---------------------------------

def routing_pallas(x2, pool, w1a, w1b, w2f, w3, *, B, C):
    """route_func forward.

    x2   : (B*C, HW)   x with spatial flattened into lanes
    pool : (HW, 10)    col 0 = 1/HW (gap1), cols 1..9 = kron(Ph, Pw).T (gap3)
    w1a,w1b : (S, C)   1x1 conv weight split across cat([gap1, gap3])
    w2f  : (S, 9)      depthwise 3x3 weights (flattened taps)
    w3   : (E*C, S)    final 1x1 conv weight
    returns (E*C, B)   routing weights (tiny, transposed)
    """
    EC = w3.shape[0]

    def kernel(x_ref, p_ref, w1a_ref, w1b_ref, w2_ref, w3_ref, out_ref):
        # [gap1 | gap3] for every (b, c) row in ONE batched MXU matmul
        # (gap1 is folded into the pooling matrix as a 1/HW column).
        A = jnp.dot(x_ref[...], p_ref[...],
                    preferred_element_type=jnp.float32)            # (B*C, 10)
        cols = []
        for b in range(B):                 # B is tiny; per-b work is a few 16x9 ops
            a1 = A[b * C:(b + 1) * C, 0:1]                          # (C, 1)  gap1
            a3 = A[b * C:(b + 1) * C, 1:]                           # (C, 9)  gap3
            y1 = (jnp.dot(w1a_ref[...], a1, preferred_element_type=jnp.float32)
                  + jnp.dot(w1b_ref[...], a3, preferred_element_type=jnp.float32))
            y1 = jnp.maximum(y1, 0.0)                               # (S, 9)
            # depthwise 3x3 (valid) on a 3x3 map == per-channel dot over 9 taps
            y2 = jnp.maximum(jnp.sum(w2_ref[...] * y1, axis=-1, keepdims=True), 0.0)
            cols.append(y2)                                         # (S, 1)
        y2_all = jnp.concatenate(cols, axis=1)                      # (S, B)
        out_ref[...] = jax.nn.sigmoid(
            jnp.dot(w3_ref[...], y2_all, preferred_element_type=jnp.float32))

    args = (x2, pool, w1a, w1b, w2f, w3)
    return pl.pallas_call(
        kernel,
        out_shape=jax.ShapeDtypeStruct((EC, B), jnp.float32),
        grid=(1,),
        in_specs=[_full_spec(a.shape) for a in args],
        out_specs=_full_spec((EC, B)),
        compiler_params=pltpu.CompilerParams(dimension_semantics=("arbitrary",)),
    )(*args)


def experts_pass1(xfp, route_eoc, w_tap, bias_eo, *, H, W, K):
    """Fused expert convolutions; one grid step per batch element ("parallel").

    xfp      : (B, C, HWp)   H-padded, spatially flattened input
    route_eoc: (B, E*O, C)   routing weights broadcast over output channels
    w_tap    : (KK, E*O, C)  conv weights, tap-major (all experts fused on rows)
    bias_eo  : (E*O, 1)
    returns  y  : (B, E*O, HW)  per-expert conv outputs (transposed, lane-dense)
             st : (B, E*O, 2)   per-batch [sum, sum-of-squares] for BN stats
    """
    B, C, HWp = xfp.shape
    EO = w_tap.shape[1]
    KK = K * K
    HW = H * W
    pad = (K - 1) // 2

    def kernel(x_ref, r_ref, w_ref, b_ref, y_ref, st_ref, acc_ref):
        xb = x_ref[...]                                        # (C, HWp)
        r_eoc = r_ref[...]                                     # (E*O, C)
        col = lax.broadcasted_iota(jnp.int32, (1, HW), 1) % W  # output column index
        acc_ref[...] = jnp.broadcast_to(b_ref[...], (EO, HW))  # start from conv bias
        for t in range(KK):                                    # K*K shifted matmuls
            dh = t // K - pad
            dw = t % K - pad
            start = (dh + pad + 1) * W + dw                    # static lane offset
            xt = xb[:, start:start + HW]                       # (C, HW) shifted view
            if dw != 0:                                        # kill W-boundary wraparound
                keep = jnp.logical_and(col + dw >= 0, col + dw < W)
                xt = xt * keep.astype(jnp.float32)
            # route folded into the tiny (E*O, C) tap weights, not the activations
            wt = w_ref[t] * r_eoc
            acc_ref[...] += jnp.dot(wt, xt, preferred_element_type=jnp.float32)
        y = acc_ref[...]
        y_ref[...] = y
        st_ref[...] = jnp.concatenate(
            [jnp.sum(y, axis=-1, keepdims=True),
             jnp.sum(y * y, axis=-1, keepdims=True)], axis=-1)

    return pl.pallas_call(
        kernel,
        out_shape=(jax.ShapeDtypeStruct((B, EO, HW), jnp.float32),
                   jax.ShapeDtypeStruct((B, EO, 2), jnp.float32)),
        grid=(B,),
        in_specs=[
            pl.BlockSpec((None, C, HWp), lambda b: (b, 0, 0)),
            pl.BlockSpec((None, EO, C), lambda b: (b, 0, 0)),
            pl.BlockSpec((KK, EO, C), lambda b: (0, 0, 0)),
            pl.BlockSpec((EO, 1), lambda b: (0, 0)),
        ],
        out_specs=(
            pl.BlockSpec((None, EO, HW), lambda b: (b, 0, 0)),
            pl.BlockSpec((None, EO, 2), lambda b: (b, 0, 0)),
        ),
        scratch_shapes=[pltpu.VMEM((EO, HW), jnp.float32)],
        compiler_params=pltpu.CompilerParams(
            dimension_semantics=("parallel",),
            vmem_limit_bytes=32 * 1024 * 1024),
    )(xfp, route_eoc, w_tap, bias_eo)


def experts_pass2(y, stats, gamma_eo, beta_eo, *, E, O, eps):
    """Training-mode BatchNorm (batch stats, biased var) + sum over experts."""
    B, EO, HW = y.shape
    inv_n = 1.0 / float(B * HW)

    def kernel(y_ref, st_ref, g_ref, bt_ref, o_ref):
        tot = jnp.sum(st_ref[...], axis=0)                  # (E*O, 2) over batches
        mu = tot[:, 0:1] * inv_n
        var = tot[:, 1:2] * inv_n - mu * mu                 # biased variance, one pass
        scale = g_ref[...] * lax.rsqrt(var + eps)
        shift = bt_ref[...] - mu * scale
        z = y_ref[...] * scale + shift                      # (E*O, HW)
        acc = z[0:O, :]
        for e in range(1, E):                               # sum experts (sublane slices)
            acc = acc + z[e * O:(e + 1) * O, :]
        o_ref[...] = acc                                    # (O, HW) lane-dense output

    return pl.pallas_call(
        kernel,
        out_shape=jax.ShapeDtypeStruct((B, O, HW), jnp.float32),
        grid=(B,),
        in_specs=[
            pl.BlockSpec((None, EO, HW), lambda b: (b, 0, 0)),
            pl.BlockSpec((B, EO, 2), lambda b: (0, 0, 0)),
            pl.BlockSpec((EO, 1), lambda b: (0, 0)),
            pl.BlockSpec((EO, 1), lambda b: (0, 0)),
        ],
        out_specs=pl.BlockSpec((None, O, HW), lambda b: (b, 0, 0)),
        compiler_params=pltpu.CompilerParams(
            dimension_semantics=("parallel",),
            vmem_limit_bytes=32 * 1024 * 1024),
    )(y, stats, gamma_eo, beta_eo)


# ------------------------------ wrapper -------------------------------------

def ddsconv_forward(x, params, *, kernel_size=3, padding=1, eps=1e-5):
    """x: (B, C, H, W) NCHW.  Returns (B, O, H, W).  stride=1, 'same' conv."""
    B, C, H, W = x.shape
    w1, w2, w3 = params["w1"], params["w2"], params["w3"]
    wconv, bconv = params["wconv"], params["bconv"]
    gamma, beta = params["gamma"], params["beta"]
    E, O = wconv.shape[0], wconv.shape[1]
    K = kernel_size
    KK = K * K
    HW = H * W
    pad = (K - 1) // 2
    assert K % 2 == 1 and padding == pad, "kernel supports stride=1 'same' odd-kernel conv"
    # TODO(synk): for large H*W, additionally tile the flattened spatial axis
    # (with a `pad`-row halo) so each grid block stays inside scoped VMEM.

    # ---- routing (route_func) ----
    Ph = adaptive_pool_matrix(H, 3)
    Pw = adaptive_pool_matrix(W, 3)
    pool = np.concatenate([np.full((HW, 1), 1.0 / HW, np.float32),
                           np.kron(Ph, Pw).T.astype(np.float32)], axis=1)   # (HW, 10)
    S = w1.shape[0]
    route_t = routing_pallas(x.reshape(B * C, HW), jnp.asarray(pool),
                             w1[:, :C], w1[:, C:], w2.reshape(S, KK), w3,
                             B=B, C=C)                                      # (E*C, B)

    # ---- tiny glue: expand route over output channels; reorder conv weights ----
    route_eoc = jnp.broadcast_to(route_t.T.reshape(B, E, 1, C),
                                 (B, E, O, C)).reshape(B, E * O, C)
    w_tap = jnp.transpose(wconv.reshape(E * O, C, KK), (2, 0, 1))           # (KK, E*O, C)

    # ---- H-pad + flatten spatial so every conv tap is a lane-shifted slice ----
    xfp = jnp.pad(x, ((0, 0), (0, 0), (pad + 1, pad + 1), (0, 0))
                  ).reshape(B, C, (H + 2 * pad + 2) * W)

    y, stats = experts_pass1(xfp, route_eoc, w_tap, bconv.reshape(E * O, 1),
                             H=H, W=W, K=K)
    out = experts_pass2(y, stats, gamma.reshape(E * O, 1), beta.reshape(E * O, 1),
                        E=E, O=O, eps=eps)                                  # (B, O, HW)
    return out.reshape(B, O, H, W)


# ---------------------------- JAX reference ----------------------------------

def ddsconv_reference(x, params, *, kernel_size=3, padding=1, eps=1e-5):
    B, C, H, W = x.shape
    w1, w2, w3 = params["w1"], params["w2"], params["w3"]
    wconv, bconv = params["wconv"], params["bconv"]
    gamma, beta = params["gamma"], params["beta"]
    E, O = wconv.shape[0], wconv.shape[1]
    Ph = jnp.asarray(adaptive_pool_matrix(H, 3))
    Pw = jnp.asarray(adaptive_pool_matrix(W, 3))

    a1 = x.mean((2, 3), keepdims=True)                                    # (B,C,1,1)
    a3 = jnp.einsum('ih,bchw,jw->bcij', Ph, x, Pw, precision='highest')   # (B,C,3,3)
    att = jnp.concatenate([jnp.broadcast_to(a1, a3.shape), a3], axis=1)   # (B,2C,3,3)
    y1 = jax.nn.relu(jnp.einsum('sc,bcij->bsij', w1, att, precision='highest'))
    y2 = jax.nn.relu(jnp.einsum('sij,bsij->bs', w2, y1, precision='highest'))
    route = jax.nn.sigmoid(jnp.einsum('es,bs->be', w3, y2, precision='highest'))

    out = jnp.zeros((B, O, H, W), jnp.float32)
    for e in range(E):
        r = route[:, e * C:(e + 1) * C].reshape(B, C, 1, 1)
        y = lax.conv_general_dilated(
            x * r, wconv[e], window_strides=(1, 1),
            padding=((padding, padding), (padding, padding)),
            dimension_numbers=('NCHW', 'OIHW', 'NCHW'),
            precision=lax.Precision.HIGHEST)
        y = y + bconv[e].reshape(1, O, 1, 1)
        mu = y.mean((0, 2, 3), keepdims=True)
        var = ((y - mu) ** 2).mean((0, 2, 3), keepdims=True)
        yn = (y - mu) * lax.rsqrt(var + eps)
        out = out + yn * gamma[e].reshape(1, O, 1, 1) + beta[e].reshape(1, O, 1, 1)
    return out


# -------------------------------- main ---------------------------------------

if __name__ == "__main__":
    # module hyper-params (small, consistent with the PyTorch module defaults)
    B, C_in, C_out, H, W = 2, 4, 8, 16, 16
    E, K, reduction = 3, 3, 16
    S = max(C_in // reduction, reduction)   # squeeze channels = 16

    key = jax.random.PRNGKey(0)
    ks = jax.random.split(key, 8)
    x = jax.random.normal(ks[0], (B, C_in, H, W), jnp.float32)

    params = {
        # route_func (all convs bias-free)
        "w1": 0.3 * jax.random.normal(ks[1], (S, 2 * C_in), jnp.float32),
        "w2": 0.3 * jax.random.normal(ks[2], (S, K, K), jnp.float32),
        "w3": 0.3 * jax.random.normal(ks[3], (E * C_in, S), jnp.float32),
        # expert convs + batchnorms
        "wconv": 0.2 * jax.random.normal(ks[4], (E, C_out, C_in, K, K), jnp.float32),
        "bconv": 0.1 * jax.random.normal(ks[5], (E, C_out), jnp.float32),
        "gamma": 1.0 + 0.1 * jax.random.normal(ks[6], (E, C_out), jnp.float32),
        "beta": 0.1 * jax.random.normal(ks[7], (E, C_out), jnp.float32),
    }

    out = ddsconv_forward(x, params, kernel_size=K, padding=1)
    out = jax.block_until_ready(out)

    ref = jax.block_until_ready(ddsconv_reference(x, params, kernel_size=K, padding=1))
    assert out.shape == (B, C_out, H, W), out.shape
    if not np.allclose(np.asarray(out), np.asarray(ref), rtol=2e-2, atol=2e-2):
        raise AssertionError(
            f"mismatch: max abs diff = {float(jnp.max(jnp.abs(out - ref)))}")

    print("KERNEL_OK")
</pallas_src>

<mosaic_0001>
module attributes {stable_mosaic.version = 11 : i64} {
  func.func @kernel(%arg0: i32, %arg1: memref<8x256xf32, #tpu.memory_space<vmem>>, %arg2: memref<256x10xf32, #tpu.memory_space<vmem>>, %arg3: memref<16x4xf32, #tpu.memory_space<vmem>>, %arg4: memref<16x4xf32, #tpu.memory_space<vmem>>, %arg5: memref<16x9xf32, #tpu.memory_space<vmem>>, %arg6: memref<12x16xf32, #tpu.memory_space<vmem>>, %arg7: memref<12x2xf32, #tpu.memory_space<vmem>>) attributes {dimension_semantics = [#tpu.dimension_semantics<arbitrary>], iteration_bounds = array<i64: 1>, scalar_prefetch = 0 : i64, scratch_operands = 0 : i64, tpu.core_type = #tpu.core_type<tc>, window_params = [{pipeline_mode = #tpu.pipeline_mode<synchronous>, transform_indices = @transform_0, window_bounds = array<i64: 8, 256>}, {pipeline_mode = #tpu.pipeline_mode<synchronous>, transform_indices = @transform_1, window_bounds = array<i64: 256, 10>}, {pipeline_mode = #tpu.pipeline_mode<synchronous>, transform_indices = @transform_2, window_bounds = array<i64: 16, 4>}, {pipeline_mode = #tpu.pipeline_mode<synchronous>, transform_indices = @transform_3, window_bounds = array<i64: 16, 4>}, {pipeline_mode = #tpu.pipeline_mode<synchronous>, transform_indices = @transform_4, window_bounds = array<i64: 16, 9>}, {pipeline_mode = #tpu.pipeline_mode<synchronous>, transform_indices = @transform_5, window_bounds = array<i64: 12, 16>}, {pipeline_mode = #tpu.pipeline_mode<synchronous>, transform_indices = @transform_6, window_bounds = array<i64: 12, 2>}]} {
    %c0 = arith.constant 0 : index
    %c0_0 = arith.constant 0 : index
    %0 = vector.load %arg1[%c0, %c0_0] : memref<8x256xf32, #tpu.memory_space<vmem>>, vector<8x256xf32>
    %c0_1 = arith.constant 0 : index
    %c0_2 = arith.constant 0 : index
    %1 = vector.load %arg2[%c0_1, %c0_2] : memref<256x10xf32, #tpu.memory_space<vmem>>, vector<256x10xf32>
    %cst = arith.constant dense<0.000000e+00> : vector<8x10xf32>
    %2 = tpu.matmul %0, %1, %cst {dimension_numbers = #tpu.dot_dimension_numbers<[1], [0], [0], [1], [0, 0, 1, 1], [], []>} : vector<8x256xf32>, vector<256x10xf32>, vector<8x10xf32> -> vector<8x10xf32>
    %3 = vector.extract_strided_slice %2 {offsets = [0, 0], sizes = [4, 1], strides = [1, 1]} : vector<8x10xf32> to vector<4x1xf32>
    %4 = vector.extract_strided_slice %2 {offsets = [0, 1], sizes = [4, 9], strides = [1, 1]} : vector<8x10xf32> to vector<4x9xf32>
    %c0_3 = arith.constant 0 : index
    %c0_4 = arith.constant 0 : index
    %5 = vector.load %arg3[%c0_3, %c0_4] : memref<16x4xf32, #tpu.memory_space<vmem>>, vector<16x4xf32>
    %cst_5 = arith.constant dense<0.000000e+00> : vector<16x1xf32>
    %6 = tpu.matmul %5, %3, %cst_5 {dimension_numbers = #tpu.dot_dimension_numbers<[1], [0], [0], [1], [0, 0, 1, 1], [], []>} : vector<16x4xf32>, vector<4x1xf32>, vector<16x1xf32> -> vector<16x1xf32>
    %c0_6 = arith.constant 0 : index
    %c0_7 = arith.constant 0 : index
    %7 = vector.load %arg4[%c0_6, %c0_7] : memref<16x4xf32, #tpu.memory_space<vmem>>, vector<16x4xf32>
    %cst_8 = arith.constant dense<0.000000e+00> : vector<16x9xf32>
    %8 = tpu.matmul %7, %4, %cst_8 {dimension_numbers = #tpu.dot_dimension_numbers<[1], [0], [0], [1], [0, 0, 1, 1], [], []>} : vector<16x4xf32>, vector<4x9xf32>, vector<16x9xf32> -> vector<16x9xf32>
    %9 = vector.broadcast %6 : vector<16x1xf32> to vector<16x9xf32>
    %10 = arith.addf %9, %8 : vector<16x9xf32>
    %cst_9 = arith.constant 0.000000e+00 : f32
    %11 = vector.broadcast %cst_9 : f32 to vector<16x9xf32>
    %12 = arith.maximumf %10, %11 : vector<16x9xf32>
    %c0_10 = arith.constant 0 : index
    %c0_11 = arith.constant 0 : index
    %13 = vector.load %arg5[%c0_10, %c0_11] : memref<16x9xf32, #tpu.memory_space<vmem>>, vector<16x9xf32>
    %14 = arith.mulf %13, %12 : vector<16x9xf32>
    %cst_12 = arith.constant dense<0.000000e+00> : vector<16xf32>
    %15 = vector.multi_reduction <add>, %14, %cst_12 [1] : vector<16x9xf32> to vector<16xf32>
    %16 = vector.shape_cast %15 : vector<16xf32> to vector<16x1xf32>
    %cst_13 = arith.constant 0.000000e+00 : f32
    %17 = vector.broadcast %cst_13 : f32 to vector<16x1xf32>
    %18 = arith.maximumf %16, %17 : vector<16x1xf32>
    %19 = vector.extract_strided_slice %2 {offsets = [4, 0], sizes = [4, 1], strides = [1, 1]} : vector<8x10xf32> to vector<4x1xf32>
    %20 = vector.extract_strided_slice %2 {offsets = [4, 1], sizes = [4, 9], strides = [1, 1]} : vector<8x10xf32> to vector<4x9xf32>
    %c0_14 = arith.constant 0 : index
    %c0_15 = arith.constant 0 : index
    %21 = vector.load %arg3[%c0_14, %c0_15] : memref<16x4xf32, #tpu.memory_space<vmem>>, vector<16x4xf32>
    %cst_16 = arith.constant dense<0.000000e+00> : vector<16x1xf32>
    %22 = tpu.matmul %21, %19, %cst_16 {dimension_numbers = #tpu.dot_dimension_numbers<[1], [0], [0], [1], [0, 0, 1, 1], [], []>} : vector<16x4xf32>, vector<4x1xf32>, vector<16x1xf32> -> vector<16x1xf32>
    %c0_17 = arith.constant 0 : index
    %c0_18 = arith.constant 0 : index
    %23 = vector.load %arg4[%c0_17, %c0_18] : memref<16x4xf32, #tpu.memory_space<vmem>>, vector<16x4xf32>
    %cst_19 = arith.constant dense<0.000000e+00> : vector<16x9xf32>
    %24 = tpu.matmul %23, %20, %cst_19 {dimension_numbers = #tpu.dot_dimension_numbers<[1], [0], [0], [1], [0, 0, 1, 1], [], []>} : vector<16x4xf32>, vector<4x9xf32>, vector<16x9xf32> -> vector<16x9xf32>
    %25 = vector.broadcast %22 : vector<16x1xf32> to vector<16x9xf32>
    %26 = arith.addf %25, %24 : vector<16x9xf32>
    %cst_20 = arith.constant 0.000000e+00 : f32
    %27 = vector.broadcast %cst_20 : f32 to vector<16x9xf32>
    %28 = arith.maximumf %26, %27 : vector<16x9xf32>
    %c0_21 = arith.constant 0 : index
    %c0_22 = arith.constant 0 : index
    %29 = vector.load %arg5[%c0_21, %c0_22] : memref<16x9xf32, #tpu.memory_space<vmem>>, vector<16x9xf32>
    %30 = arith.mulf %29, %28 : vector<16x9xf32>
    %cst_23 = arith.constant dense<0.000000e+00> : vector<16xf32>
    %31 = vector.multi_reduction <add>, %30, %cst_23 [1] : vector<16x9xf32> to vector<16xf32>
    %32 = vector.shape_cast %31 : vector<16xf32> to vector<16x1xf32>
    %cst_24 = arith.constant 0.000000e+00 : f32
    %33 = vector.broadcast %cst_24 : f32 to vector<16x1xf32>
    %34 = arith.maximumf %32, %33 : vector<16x1xf32>
    %35 = tpu.concatenate %18, %34 in 1 : vector<16x1xf32>, vector<16x1xf32> -> vector<16x2xf32>
    %c0_25 = arith.constant 0 : index
    %c0_26 = arith.constant 0 : index
    %36 = vector.load %arg6[%c0_25, %c0_26] : memref<12x16xf32, #tpu.memory_space<vmem>>, vector<12x16xf32>
    %cst_27 = arith.constant dense<0.000000e+00> : vector<12x2xf32>
    %37 = tpu.matmul %36, %35, %cst_27 {dimension_numbers = #tpu.dot_dimension_numbers<[1], [0], [0], [1], [0, 0, 1, 1], [], []>} : vector<12x16xf32>, vector<16x2xf32>, vector<12x2xf32> -> vector<12x2xf32>
    %38 = arith.negf %37 : vector<12x2xf32>
    %39 = math.exp %38 : vector<12x2xf32>
    %cst_28 = arith.constant 1.000000e+00 : f32
    %40 = vector.broadcast %cst_28 : f32 to vector<12x2xf32>
    %41 = arith.addf %40, %39 : vector<12x2xf32>
    %42 = arith.divf %40, %41 : vector<12x2xf32>
    %c0_29 = arith.constant 0 : index
    %c0_30 = arith.constant 0 : index
    %43 = vector.load %arg7[%c0_29, %c0_30] : memref<12x2xf32, #tpu.memory_space<vmem>>, vector<12x2xf32>
    tpu.vector_store %arg7[%c0_29, %c0_30], %42 {strides = array<i32>} : memref<12x2xf32, #tpu.memory_space<vmem>>, vector<12x2xf32>,
    return
  }
  func.func @transform_0(%arg0: i32) -> (i32, i32) {
    %c0_i32 = arith.constant 0 : i32
    %c0_i32_0 = arith.constant 0 : i32
    %c0_i32_1 = arith.constant 0 : i32
    return %c0_i32, %c0_i32_0 : i32, i32
  }
  func.func @transform_1(%arg0: i32) -> (i32, i32) {
    %c0_i32 = arith.constant 0 : i32
    %c0_i32_0 = arith.constant 0 : i32
    %c0_i32_1 = arith.constant 0 : i32
    return %c0_i32, %c0_i32_0 : i32, i32
  }
  func.func @transform_2(%arg0: i32) -> (i32, i32) {
    %c0_i32 = arith.constant 0 : i32
    %c0_i32_0 = arith.constant 0 : i32
    %c0_i32_1 = arith.constant 0 : i32
    return %c0_i32, %c0_i32_0 : i32, i32
  }
  func.func @transform_3(%arg0: i32) -> (i32, i32) {
    %c0_i32 = arith.constant 0 : i32
    %c0_i32_0 = arith.constant 0 : i32
    %c0_i32_1 = arith.constant 0 : i32
    return %c0_i32, %c0_i32_0 : i32, i32
  }
  func.func @transform_4(%arg0: i32) -> (i32, i32) {
    %c0_i32 = arith.constant 0 : i32
    %c0_i32_0 = arith.constant 0 : i32
    %c0_i32_1 = arith.constant 0 : i32
    return %c0_i32, %c0_i32_0 : i32, i32
  }
  func.func @transform_5(%arg0: i32) -> (i32, i32) {
    %c0_i32 = arith.constant 0 : i32
    %c0_i32_0 = arith.constant 0 : i32
    %c0_i32_1 = arith.constant 0 : i32
    return %c0_i32, %c0_i32_0 : i32, i32
  }
  func.func @transform_6(%arg0: i32) -> (i32, i32) {
    %c0_i32 = arith.constant 0 : i32
    %c0_i32_0 = arith.constant 0 : i32
    %c0_i32_1 = arith.constant 0 : i32
    return %c0_i32, %c0_i32_0 : i32, i32
  }
}

</mosaic_0001>

<llo_original>
// kernel: tpu_custom_call.1
$region0: #{tpu_custom_call.1}
  #allocation0 [shape = 'u32[]', space=smem, size = 0x4, offset = 0x4, fixed_abs, tag = 'smem constant byte address 0x4 - core index']
  #allocation1 [shape = 'u32[144,128]{1,0:T(1,128)}', space=vmem, size = 0x12000, scoped, tag = 'internal scratch']
  %s0 = inlined_call_operand.vmem [shape: f32[8,256], index: 0, kind: input, shape index: {}]
  %s1 = inlined_call_operand.vmem [shape: f32[256,10], index: 1, kind: input, shape index: {}]
  %s2 = inlined_call_operand.vmem [shape: f32[16,4], index: 2, kind: input, shape index: {}]
  %s3 = inlined_call_operand.vmem [shape: f32[16,4], index: 3, kind: input, shape index: {}]
  %s4 = inlined_call_operand.vmem [shape: f32[16,9], index: 4, kind: input, shape index: {}]
  %s5 = inlined_call_operand.vmem [shape: f32[12,16], index: 5, kind: input, shape index: {}]
  %s6 = inlined_call_operand.vmem [shape: f32[12,2], index: 6, kind: output, shape index: {}]
  %s7 = sld [smem:[#allocation0]]
  $region34: #{tpu_custom_call.1} parent=0
    _
  %s9 = ssub.s32 1, %s7
  %s10 = scalar_select 0, %s9, %s7
  // Predicated region
  $region2: #{tpu_custom_call.1} parent=0 // pred_check
    _
  $region3: #{tpu_custom_call.1} parent=0 // pred_check_branch
    %12 = sbr.rel (0) target = $region5
  $region4: #{tpu_custom_call.1} parent=0 // pred_region
    _
  $region5: #{tpu_custom_call.1} parent=0 // pred_fallthru
    _
  // Predicated region
  $region6: #{tpu_custom_call.1} parent=0 // pred_check
    _
  $region7: #{tpu_custom_call.1} parent=0 // pred_check_branch
    %14 = sbr.rel (0) target = $region9
  $region8: #{tpu_custom_call.1} parent=0 // pred_region
    _
  $region9: #{tpu_custom_call.1} parent=0 // pred_fallthru
    _
  // Predicated region
  $region10: #{tpu_custom_call.1} parent=0 // pred_check
    _
  $region11: #{tpu_custom_call.1} parent=0 // pred_check_branch
    %16 = sbr.rel (0) target = $region13
  $region12: #{tpu_custom_call.1} parent=0 // pred_region
    _
  $region13: #{tpu_custom_call.1} parent=0 // pred_fallthru
    _
  // Predicated region
  $region14: #{tpu_custom_call.1} parent=0 // pred_check
    _
  $region15: #{tpu_custom_call.1} parent=0 // pred_check_branch
    %18 = sbr.rel (0) target = $region17
  $region16: #{tpu_custom_call.1} parent=0 // pred_region
    _
  $region17: #{tpu_custom_call.1} parent=0 // pred_fallthru
    _
  // Predicated region
  $region18: #{tpu_custom_call.1} parent=0 // pred_check
    _
  $region19: #{tpu_custom_call.1} parent=0 // pred_check_branch
    %20 = sbr.rel (0) target = $region21
  $region20: #{tpu_custom_call.1} parent=0 // pred_region
    _
  $region21: #{tpu_custom_call.1} parent=0 // pred_fallthru
    _
  // Predicated region
  $region22: #{tpu_custom_call.1} parent=0 // pred_check
    _
  $region23: #{tpu_custom_call.1} parent=0 // pred_check_branch
    %22 = sbr.rel (0) target = $region25
  $region24: #{tpu_custom_call.1} parent=0 // pred_region
    _
  $region25: #{tpu_custom_call.1} parent=0 // pred_fallthru
    _
  %v23 = vld [vmem:[%s0] sm:$0xff]
  %v24 = vld [vmem:[%s0 + $0x8] sm:$0xff]
  %v25 = vld [vmem:[%s1] sm:$0xff]
  %v26 = vld [vmem:[%s1 + $0x8] sm:$0xff]
  %v27 = vld [vmem:[%s1 + $0x10] sm:$0xff]
  %v28 = vld [vmem:[%s1 + $0x18] sm:$0xff]
  %v29 = vld [vmem:[%s1 + $0x20] sm:$0xff]
  %v30 = vld [vmem:[%s1 + $0x28] sm:$0xff]
  %v31 = vld [vmem:[%s1 + $0x30] sm:$0xff]
  %v32 = vld [vmem:[%s1 + $0x38] sm:$0xff]
  %v33 = vld [vmem:[%s1 + $0x40] sm:$0xff]
  %v34 = vld [vmem:[%s1 + $0x48] sm:$0xff]
  %v35 = vld [vmem:[%s1 + $0x50] sm:$0xff]
  %v36 = vld [vmem:[%s1 + $0x58] sm:$0xff]
  %v37 = vld [vmem:[%s1 + $0x60] sm:$0xff]
  %v38 = vld [vmem:[%s1 + $0x68] sm:$0xff]
  %v39 = vld [vmem:[%s1 + $0x70] sm:$0xff]
  %v40 = vld [vmem:[%s1 + $0x78] sm:$0xff]
  %v41 = vld [vmem:[%s1 + $0x80] sm:$0xff]
  %v42 = vld [vmem:[%s1 + $0x88] sm:$0xff]
  %v43 = vld [vmem:[%s1 + $0x90] sm:$0xff]
  %v44 = vld [vmem:[%s1 + $0x98] sm:$0xff]
  %v45 = vld [vmem:[%s1 + $0xa0] sm:$0xff]
  %v46 = vld [vmem:[%s1 + $0xa8] sm:$0xff]
  %v47 = vld [vmem:[%s1 + $0xb0] sm:$0xff]
  %v48 = vld [vmem:[%s1 + $0xb8] sm:$0xff]
  %v49 = vld [vmem:[%s1 + $0xc0] sm:$0xff]
  %v50 = vld [vmem:[%s1 + $0xc8] sm:$0xff]
  %v51 = vld [vmem:[%s1 + $0xd0] sm:$0xff]
  %v52 = vld [vmem:[%s1 + $0xd8] sm:$0xff]
  %v53 = vld [vmem:[%s1 + $0xe0] sm:$0xff]
  %v54 = vld [vmem:[%s1 + $0xe8] sm:$0xff]
  %v55 = vld [vmem:[%s1 + $0xf0] sm:$0xff]
  %v56 = vld [vmem:[%s1 + $0xf8] sm:$0xff]
  %57 = vmatprep.subr.mxu0 0.0
  %58 = vmatpush1.msra.mxu0 %v40
  %59 = vmatprep.subr.mxu0 0.0
  %60 = vmatpush1.msra.mxu0 %v39
  %61 = vmatprep.subr.mxu0 0.0
  %62 = vmatpush1.msra.mxu0 %v38
  %63 = vmatprep.subr.mxu0 0.0
  %64 = vmatpush1.msra.mxu0 %v37
  %65 = vmatprep.subr.mxu0 0.0
  %66 = vmatpush1.msra.mxu0 %v36
  %67 = vmatprep.subr.mxu0 0.0
  %68 = vmatpush1.msra.mxu0 %v35
  %69 = vmatprep.subr.mxu0 0.0
  %70 = vmatpush1.msra.mxu0 %v34
  %71 = vmatprep.subr.mxu0 0.0
  %72 = vmatpush1.msra.mxu0 %v33
  %73 = vmatprep.subr.mxu0 0.0
  %74 = vmatpush1.msra.mxu0 %v32
  %75 = vmatprep.subr.mxu0 0.0
  %76 = vmatpush1.msra.mxu0 %v31
  %77 = vmatprep.subr.mxu0 0.0
  %78 = vmatpush1.msra.mxu0 %v30
  %79 = vmatprep.subr.mxu0 0.0
  %80 = vmatpush1.msra.mxu0 %v29
  %81 = vmatprep.subr.mxu0 0.0
  %82 = vmatpush1.msra.mxu0 %v28
  %83 = vmatprep.subr.mxu0 0.0
  %84 = vmatpush1.msra.mxu0 %v27
  %85 = vmatprep.subr.mxu0 0.0
  %86 = vmatpush1.msra.mxu0 %v26
  %87 = vmatprep.subr.mxu0 0.0
  %88 = vmatpush1.msra.mxu0 %v25
  %89 = vmatprep.subr.mxu0 0.0
  %90 = vmatpush2.msra.mxu0 %v56
  %91 = vmatprep.subr.mxu0 0.0
  %92 = vmatpush2.msra.mxu0 %v55
  %93 = vmatprep.subr.mxu0 0.0
  %94 = vmatpush2.msra.mxu0 %v54
  %95 = vmatprep.subr.mxu0 0.0
  %96 = vmatpush2.msra.mxu0 %v53
  %97 = vmatprep.subr.mxu0 0.0
  %98 = vmatpush2.msra.mxu0 %v52
  %99 = vmatprep.subr.mxu0 0.0
  %100 = vmatpush2.msra.mxu0 %v51
  %101 = vmatprep.subr.mxu0 0.0
  %102 = vmatpush2.msra.mxu0 %v50
  %103 = vmatprep.subr.mxu0 0.0
  %104 = vmatpush2.msra.mxu0 %v49
  %105 = vmatprep.subr.mxu0 0.0
  %106 = vmatpush2.msra.mxu0 %v48
  %107 = vmatprep.subr.mxu0 0.0
  %108 = vmatpush2.msra.mxu0 %v47
  %109 = vmatprep.subr.mxu0 0.0
  %110 = vmatpush2.msra.mxu0 %v46
  %111 = vmatprep.subr.mxu0 0.0
  %112 = vmatpush2.msra.mxu0 %v45
  %113 = vmatprep.subr.mxu0 0.0
  %114 = vmatpush2.msra.mxu0 %v44
  %115 = vmatprep.subr.mxu0 0.0
  %116 = vmatpush2.msra.mxu0 %v43
  %117 = vmatprep.subr.mxu0 0.0
  %118 = vmatpush2.msra.mxu0 %v42
  %119 = vmatprep.subr.mxu0 0.0
  %120 = vmatpush2.msra.mxu0 %v41
  %121 = vmatprep.mubr.f32.mxu0 %v24
  %122 = vmatmul.mubr.f32.gmra.mxu0 %v23
  %v123 = vpop.f32.mrf.mxu0
  %v124 = vadd.f32 0.0, %v123
  %v125 = vpop.f32.mrf.mxu0
  %126 = vdwg.mxu0
  %v127 = vld [vmem:[%s2] sm:$0xff]
  %v128 = vld [vmem:[%s2 + $0x8] sm:$0xff]
  %vm129 = vcmask 31744
  %v131 = vsel %vm129, %v127, 0
  %v134 = vsel %vm129, %v128, 0
  %vm136 = vcmask 1043456
  %v138 = vsel %vm136, %v124, 0
  %140 = vmatprep.subr.mxu0 0.0
  %141 = vmatpush1.msra.mxu0 0.0
  %142 = vmatprep.subr.mxu0 0.0
  %143 = vmatpush1.msra.mxu0 0.0
  %144 = vmatprep.subr.mxu0 0.0
  %145 = vmatpush1.msra.mxu0 0.0
  %146 = vmatprep.subr.mxu0 0.0
  %147 = vmatpush1.msra.mxu0 0.0
  %148 = vmatprep.subr.mxu0 0.0
  %149 = vmatpush1.msra.mxu0 0.0
  %150 = vmatprep.subr.mxu0 0.0
  %151 = vmatpush1.msra.mxu0 0.0
  %152 = vmatprep.subr.mxu0 0.0
  %153 = vmatpush1.msra.mxu0 0.0
  %154 = vmatprep.subr.mxu0 0.0
  %155 = vmatpush1.msra.mxu0 0.0
  %156 = vmatprep.subr.mxu0 0.0
  %157 = vmatpush1.msra.mxu0 0.0
  %158 = vmatprep.subr.mxu0 0.0
  %159 = vmatpush1.msra.mxu0 0.0
  %160 = vmatprep.subr.mxu0 0.0
  %161 = vmatpush1.msra.mxu0 0.0
  %162 = vmatprep.subr.mxu0 0.0
  %163 = vmatpush1.msra.mxu0 0.0
  %164 = vmatprep.subr.mxu0 0.0
  %165 = vmatpush1.msra.mxu0 0.0
  %166 = vmatprep.subr.mxu0 0.0
  %167 = vmatpush1.msra.mxu0 0.0
  %168 = vmatprep.subr.mxu0 0.0
  %169 = vmatpush1.msra.mxu0 0.0
  %170 = vmatprep.subr.mxu0 0.0
  %171 = vmatpush1.msra.mxu0 %v138
  %172 = vmatprep.subr.mxu0 0.0
  %173 = vmatpush2.msra.mxu0 0.0
  %174 = vmatprep.subr.mxu0 0.0
  %175 = vmatpush2.msra.mxu0 0.0
  %176 = vmatprep.subr.mxu0 0.0
  %177 = vmatpush2.msra.mxu0 0.0
  %178 = vmatprep.subr.mxu0 0.0
  %179 = vmatpush2.msra.mxu0 0.0
  %180 = vmatprep.subr.mxu0 0.0
  %181 = vmatpush2.msra.mxu0 0.0
  %182 = vmatprep.subr.mxu0 0.0
  %183 = vmatpush2.msra.mxu0 0.0
  %184 = vmatprep.subr.mxu0 0.0
  %185 = vmatpush2.msra.mxu0 0.0
  %186 = vmatprep.subr.mxu0 0.0
  %187 = vmatpush2.msra.mxu0 0.0
  %188 = vmatprep.subr.mxu0 0.0
  %189 = vmatpush2.msra.mxu0 0.0
  %190 = vmatprep.subr.mxu0 0.0
  %191 = vmatpush2.msra.mxu0 0.0
  %192 = vmatprep.subr.mxu0 0.0
  %193 = vmatpush2.msra.mxu0 0.0
  %194 = vmatprep.subr.mxu0 0.0
  %195 = vmatpush2.msra.mxu0 0.0
  %196 = vmatprep.subr.mxu0 0.0
  %197 = vmatpush2.msra.mxu0 0.0
  %198 = vmatprep.subr.mxu0 0.0
  %199 = vmatpush2.msra.mxu0 0.0
  %200 = vmatprep.subr.mxu0 0.0
  %201 = vmatpush2.msra.mxu0 0.0
  %202 = vmatprep.subr.mxu0 0.0
  %203 = vmatpush2.msra.mxu0 0.0
  %204 = vmatprep.mubr.f32.mxu0 0.0
  %205 = vmatmul.mubr.f32.gmra.mxu0 %v131
  %v206 = vpop.f32.mrf.mxu0
  %v207 = vadd.f32 0.0, %v206
  %v208 = vpop.f32.mrf.mxu0
  %209 = vmatprep.mubr.f32.mxu0 0.0
  %210 = vmatmul.mubr.f32.gmra.mxu0 %v134
  %v211 = vpop.f32.mrf.mxu0
  %v212 = vadd.f32 0.0, %v211
  %v213 = vpop.f32.mrf.mxu0
  %214 = vdwg.mxu0
  %v215 = vld [vmem:[%s3] sm:$0xff]
  %v216 = vld [vmem:[%s3 + $0x8] sm:$0xff]
  %217 = vrot.lane.b32.xlu0 %v124, 127
  %v218 = vpop.permute.xlu0 %217
  %v220 = vsel %vm129, %v215, 0
  %v223 = vsel %vm129, %v216, 0
  %v225 = vsel %vm136, %v218, 0
  %227 = vmatprep.subr.mxu0 0.0
  %228 = vmatpush1.msra.mxu0 0.0
  %229 = vmatprep.subr.mxu0 0.0
  %230 = vmatpush1.msra.mxu0 0.0
  %231 = vmatprep.subr.mxu0 0.0
  %232 = vmatpush1.msra.mxu0 0.0
  %233 = vmatprep.subr.mxu0 0.0
  %234 = vmatpush1.msra.mxu0 0.0
  %235 = vmatprep.subr.mxu0 0.0
  %236 = vmatpush1.msra.mxu0 0.0
  %237 = vmatprep.subr.mxu0 0.0
  %238 = vmatpush1.msra.mxu0 0.0
  %239 = vmatprep.subr.mxu0 0.0
  %240 = vmatpush1.msra.mxu0 0.0
  %241 = vmatprep.subr.mxu0 0.0
  %242 = vmatpush1.msra.mxu0 0.0
  %243 = vmatprep.subr.mxu0 0.0
  %244 = vmatpush1.msra.mxu0 0.0
  %245 = vmatprep.subr.mxu0 0.0
  %246 = vmatpush1.msra.mxu0 0.0
  %247 = vmatprep.subr.mxu0 0.0
  %248 = vmatpush1.msra.mxu0 0.0
  %249 = vmatprep.subr.mxu0 0.0
  %250 = vmatpush1.msra.mxu0 0.0
  %251 = vmatprep.subr.mxu0 0.0
  %252 = vmatpush1.msra.mxu0 0.0
  %253 = vmatprep.subr.mxu0 0.0
  %254 = vmatpush1.msra.mxu0 0.0
  %255 = vmatprep.subr.mxu0 0.0
  %256 = vmatpush1.msra.mxu0 0.0
  %257 = vmatprep.subr.mxu0 0.0
  %258 = vmatpush1.msra.mxu0 %v225
  %259 = vmatprep.subr.mxu0 0.0
  %260 = vmatpush2.msra.mxu0 0.0
  %261 = vmatprep.subr.mxu0 0.0
  %262 = vmatpush2.msra.mxu0 0.0
  %263 = vmatprep.subr.mxu0 0.0
  %264 = vmatpush2.msra.mxu0 0.0
  %265 = vmatprep.subr.mxu0 0.0
  %266 = vmatpush2.msra.mxu0 0.0
  %267 = vmatprep.subr.mxu0 0.0
  %268 = vmatpush2.msra.mxu0 0.0
  %269 = vmatprep.subr.mxu0 0.0
  %270 = vmatpush2.msra.mxu0 0.0
  %271 = vmatprep.subr.mxu0 0.0
  %272 = vmatpush2.msra.mxu0 0.0
  %273 = vmatprep.subr.mxu0 0.0
  %274 = vmatpush2.msra.mxu0 0.0
  %275 = vmatprep.subr.mxu0 0.0
  %276 = vmatpush2.msra.mxu0 0.0
  %277 = vmatprep.subr.mxu0 0.0
  %278 = vmatpush2.msra.mxu0 0.0
  %279 = vmatprep.subr.mxu0 0.0
  %280 = vmatpush2.msra.mxu0 0.0
  %281 = vmatprep.subr.mxu0 0.0
  %282 = vmatpush2.msra.mxu0 0.0
  %283 = vmatprep.subr.mxu0 0.0
  %284 = vmatpush2.msra.mxu0 0.0
  %285 = vmatprep.subr.mxu0 0.0
  %286 = vmatpush2.msra.mxu0 0.0
  %287 = vmatprep.subr.mxu0 0.0
  %288 = vmatpush2.msra.mxu0 0.0
  %289 = vmatprep.subr.mxu0 0.0
  %290 = vmatpush2.msra.mxu0 0.0
  %291 = vmatprep.mubr.f32.mxu0 0.0
  %292 = vmatmul.mubr.f32.gmra.mxu0 %v220
  %v293 = vpop.f32.mrf.mxu0
  %v294 = vadd.f32 0.0, %v293
  %v295 = vpop.f32.mrf.mxu0
  %296 = vmatprep.mubr.f32.mxu0 0.0
  %297 = vmatmul.mubr.f32.gmra.mxu0 %v223
  %v298 = vpop.f32.mrf.mxu0
  %v299 = vadd.f32 0.0, %v298
  %v300 = vpop.f32.mrf.mxu0
  %301 = vdwg.mxu0
  %303 = vset.pattern.permute.xlu0 0
  %304 = vperm.xlu0 %303, %v207
  %v305 = vpop.permute.xlu0 %304
  %308 = vset.pattern.permute.xlu0 0
  %309 = vperm.xlu0 %308, %v212
  %v310 = vpop.permute.xlu0 %309
  %v312 = vadd.f32 %v305, %v294
  %v313 = vadd.f32 %v310, %v299
  %v314 = vmax.f32 %v312, 0.0
  %v315 = vmax.f32 %v313, 0.0
  %v316 = vld [vmem:[%s4] sm:$0xff]
  %v317 = vld [vmem:[%s4 + $0x8] sm:$0xff]
  %v318 = vmul.f32 %v316, %v314
  %v319 = vmul.f32 %v317, %v315
  %vm320 = vcmask 72704
  %v321 = vsel %vm320, %v318, 0.0
  %322 = vadd.xlane.f32.xlu0 %v321
  %v323 = vpop.xlane.xlu0 %322
  %v324 = vsel %vm320, %v319, 0.0
  %325 = vadd.xlane.f32.xlu0 %v324
  %v326 = vpop.xlane.xlu0 %325
  %v327 = vmax.f32 %v323, 0.0
  %v328 = vmax.f32 %v326, 0.0
  %v329 = vrot.slane %v124, 4
  %v330 = vsel %vm136, %v329, 0
  %332 = vmatprep.subr.mxu0 0.0
  %333 = vmatpush1.msra.mxu0 0.0
  %334 = vmatprep.subr.mxu0 0.0
  %335 = vmatpush1.msra.mxu0 0.0
  %336 = vmatprep.subr.mxu0 0.0
  %337 = vmatpush1.msra.mxu0 0.0
  %338 = vmatprep.subr.mxu0 0.0
  %339 = vmatpush1.msra.mxu0 0.0
  %340 = vmatprep.subr.mxu0 0.0
  %341 = vmatpush1.msra.mxu0 0.0
  %342 = vmatprep.subr.mxu0 0.0
  %343 = vmatpush1.msra.mxu0 0.0
  %344 = vmatprep.subr.mxu0 0.0
  %345 = vmatpush1.msra.mxu0 0.0
  %346 = vmatprep.subr.mxu0 0.0
  %347 = vmatpush1.msra.mxu0 0.0
  %348 = vmatprep.subr.mxu0 0.0
  %349 = vmatpush1.msra.mxu0 0.0
  %350 = vmatprep.subr.mxu0 0.0
  %351 = vmatpush1.msra.mxu0 0.0
  %352 = vmatprep.subr.mxu0 0.0
  %353 = vmatpush1.msra.mxu0 0.0
  %354 = vmatprep.subr.mxu0 0.0
  %355 = vmatpush1.msra.mxu0 0.0
  %356 = vmatprep.subr.mxu0 0.0
  %357 = vmatpush1.msra.mxu0 0.0
  %358 = vmatprep.subr.mxu0 0.0
  %359 = vmatpush1.msra.mxu0 0.0
  %360 = vmatprep.subr.mxu0 0.0
  %361 = vmatpush1.msra.mxu0 0.0
  %362 = vmatprep.subr.mxu0 0.0
  %363 = vmatpush1.msra.mxu0 %v330
  %364 = vmatprep.subr.mxu0 0.0
  %365 = vmatpush2.msra.mxu0 0.0
  %366 = vmatprep.subr.mxu0 0.0
  %367 = vmatpush2.msra.mxu0 0.0
  %368 = vmatprep.subr.mxu0 0.0
  %369 = vmatpush2.msra.mxu0 0.0
  %370 = vmatprep.subr.mxu0 0.0
  %371 = vmatpush2.msra.mxu0 0.0
  %372 = vmatprep.subr.mxu0 0.0
  %373 = vmatpush2.msra.mxu0 0.0
  %374 = vmatprep.subr.mxu0 0.0
  %375 = vmatpush2.msra.mxu0 0.0
  %376 = vmatprep.subr.mxu0 0.0
  %377 = vmatpush2.msra.mxu0 0.0
  %378 = vmatprep.subr.mxu0 0.0
  %379 = vmatpush2.msra.mxu0 0.0
  %380 = vmatprep.subr.mxu0 0.0
  %381 = vmatpush2.msra.mxu0 0.0
  %382 = vmatprep.subr.mxu0 0.0
  %383 = vmatpush2.msra.mxu0 0.0
  %384 = vmatprep.subr.mxu0 0.0
  %385 = vmatpush2.msra.mxu0 0.0
  %386 = vmatprep.subr.mxu0 0.0
  %387 = vmatpush2.msra.mxu0 0.0
  %388 = vmatprep.subr.mxu0 0.0
  %389 = vmatpush2.msra.mxu0 0.0
  %390 = vmatprep.subr.mxu0 0.0
  %391 = vmatpush2.msra.mxu0 0.0
  %392 = vmatprep.subr.mxu0 0.0
  %393 = vmatpush2.msra.mxu0 0.0
  %394 = vmatprep.subr.mxu0 0.0
  %395 = vmatpush2.msra.mxu0 0.0
  %396 = vmatprep.mubr.f32.mxu0 0.0
  %397 = vmatmul.mubr.f32.gmra.mxu0 %v131
  %v398 = vpop.f32.mrf.mxu0
  %v399 = vadd.f32 0.0, %v398
  %v400 = vpop.f32.mrf.mxu0
  %401 = vmatprep.mubr.f32.mxu0 0.0
  %402 = vmatmul.mubr.f32.gmra.mxu0 %v134
  %v403 = vpop.f32.mrf.mxu0
  %v404 = vadd.f32 0.0, %v403
  %v405 = vpop.f32.mrf.mxu0
  %406 = vdwg.mxu0
  %407 = vrot.lane.b32.xlu0 %v329, 127
  %v408 = vpop.permute.xlu0 %407
  %v409 = vsel %vm136, %v408, 0
  %411 = vmatprep.subr.mxu0 0.0
  %412 = vmatpush1.msra.mxu0 0.0
  %413 = vmatprep.subr.mxu0 0.0
  %414 = vmatpush1.msra.mxu0 0.0
  %415 = vmatprep.subr.mxu0 0.0
  %416 = vmatpush1.msra.mxu0 0.0
  %417 = vmatprep.subr.mxu0 0.0
  %418 = vmatpush1.msra.mxu0 0.0
  %419 = vmatprep.subr.mxu0 0.0
  %420 = vmatpush1.msra.mxu0 0.0
  %421 = vmatprep.subr.mxu0 0.0
  %422 = vmatpush1.msra.mxu0 0.0
  %423 = vmatprep.subr.mxu0 0.0
  %424 = vmatpush1.msra.mxu0 0.0
  %425 = vmatprep.subr.mxu0 0.0
  %426 = vmatpush1.msra.mxu0 0.0
  %427 = vmatprep.subr.mxu0 0.0
  %428 = vmatpush1.msra.mxu0 0.0
  %429 = vmatprep.subr.mxu0 0.0
  %430 = vmatpush1.msra.mxu0 0.0
  %431 = vmatprep.subr.mxu0 0.0
  %432 = vmatpush1.msra.mxu0 0.0
  %433 = vmatprep.subr.mxu0 0.0
  %434 = vmatpush1.msra.mxu0 0.0
  %435 = vmatprep.subr.mxu0 0.0
  %436 = vmatpush1.msra.mxu0 0.0
  %437 = vmatprep.subr.mxu0 0.0
  %438 = vmatpush1.msra.mxu0 0.0
  %439 = vmatprep.subr.mxu0 0.0
  %440 = vmatpush1.msra.mxu0 0.0
  %441 = vmatprep.subr.mxu0 0.0
  %442 = vmatpush1.msra.mxu0 %v409
  %443 = vmatprep.subr.mxu0 0.0
  %444 = vmatpush2.msra.mxu0 0.0
  %445 = vmatprep.subr.mxu0 0.0
  %446 = vmatpush2.msra.mxu0 0.0
  %447 = vmatprep.subr.mxu0 0.0
  %448 = vmatpush2.msra.mxu0 0.0
  %449 = vmatprep.subr.mxu0 0.0
  %450 = vmatpush2.msra.mxu0 0.0
  %451 = vmatprep.subr.mxu0 0.0
  %452 = vmatpush2.msra.mxu0 0.0
  %453 = vmatprep.subr.mxu0 0.0
  %454 = vmatpush2.msra.mxu0 0.0
  %455 = vmatprep.subr.mxu0 0.0
  %456 = vmatpush2.msra.mxu0 0.0
  %457 = vmatprep.subr.mxu0 0.0
  %458 = vmatpush2.msra.mxu0 0.0
  %459 = vmatprep.subr.mxu0 0.0
  %460 = vmatpush2.msra.mxu0 0.0
  %461 = vmatprep.subr.mxu0 0.0
  %462 = vmatpush2.msra.mxu0 0.0
  %463 = vmatprep.subr.mxu0 0.0
  %464 = vmatpush2.msra.mxu0 0.0
  %465 = vmatprep.subr.mxu0 0.0
  %466 = vmatpush2.msra.mxu0 0.0
  %467 = vmatprep.subr.mxu0 0.0
  %468 = vmatpush2.msra.mxu0 0.0
  %469 = vmatprep.subr.mxu0 0.0
  %470 = vmatpush2.msra.mxu0 0.0
  %471 = vmatprep.subr.mxu0 0.0
  %472 = vmatpush2.msra.mxu0 0.0
  %473 = vmatprep.subr.mxu0 0.0
  %474 = vmatpush2.msra.mxu0 0.0
  %475 = vmatprep.mubr.f32.mxu0 0.0
  %476 = vmatmul.mubr.f32.gmra.mxu0 %v220
  %v477 = vpop.f32.mrf.mxu0
  %v478 = vadd.f32 0.0, %v477
  %v479 = vpop.f32.mrf.mxu0
  %480 = vmatprep.mubr.f32.mxu0 0.0
  %481 = vmatmul.mubr.f32.gmra.mxu0 %v223
  %v482 = vpop.f32.mrf.mxu0
  %v483 = vadd.f32 0.0, %v482
  %v484 = vpop.f32.mrf.mxu0
  %485 = vdwg.mxu0
  %487 = vset.pattern.permute.xlu0 0
  %488 = vperm.xlu0 %487, %v399
  %v489 = vpop.permute.xlu0 %488
  %492 = vset.pattern.permute.xlu0 0
  %493 = vperm.xlu0 %492, %v404
  %v494 = vpop.permute.xlu0 %493
  %v496 = vadd.f32 %v489, %v478
  %v497 = vadd.f32 %v494, %v483
  %v498 = vmax.f32 %v496, 0.0
  %v499 = vmax.f32 %v497, 0.0
  %v500 = vmul.f32 %v316, %v498
  %v501 = vmul.f32 %v317, %v499
  %v502 = vsel %vm320, %v500, 0.0
  %503 = vadd.xlane.f32.xlu0 %v502
  %v504 = vpop.xlane.xlu0 %503
  %v505 = vsel %vm320, %v501, 0.0
  %506 = vadd.xlane.f32.xlu0 %v505
  %v507 = vpop.xlane.xlu0 %506
  %v508 = vmax.f32 %v504, 0.0
  %v509 = vmax.f32 %v507, 0.0
  %vm510 = vcmask 7168
  %v511 = vsel %vm510, %v327, %v508
  %v512 = vsel %vm510, %v328, %v509
  %v513 = vld [vmem:[%s5] sm:$0xff]
  %v514 = vld [vmem:[%s5 + $0x8] sm:$0xf]
  %vm515 = vcmask 130048
  %v517 = vsel %vm515, %v513, 0
  %v520 = vsel %vm515, %v514, 0
  %522 = vmatprep.subr.mxu0 0.0
  %523 = vmatpush1.msra.mxu0 0.0
  %524 = vmatprep.subr.mxu0 0.0
  %525 = vmatpush1.msra.mxu0 0.0
  %526 = vmatprep.subr.mxu0 0.0
  %527 = vmatpush1.msra.mxu0 0.0
  %528 = vmatprep.subr.mxu0 0.0
  %529 = vmatpush1.msra.mxu0 0.0
  %530 = vmatprep.subr.mxu0 0.0
  %531 = vmatpush1.msra.mxu0 0.0
  %532 = vmatprep.subr.mxu0 0.0
  %533 = vmatpush1.msra.mxu0 0.0
  %534 = vmatprep.subr.mxu0 0.0
  %535 = vmatpush1.msra.mxu0 0.0
  %536 = vmatprep.subr.mxu0 0.0
  %537 = vmatpush1.msra.mxu0 0.0
  %538 = vmatprep.subr.mxu0 0.0
  %539 = vmatpush1.msra.mxu0 0.0
  %540 = vmatprep.subr.mxu0 0.0
  %541 = vmatpush1.msra.mxu0 0.0
  %542 = vmatprep.subr.mxu0 0.0
  %543 = vmatpush1.msra.mxu0 0.0
  %544 = vmatprep.subr.mxu0 0.0
  %545 = vmatpush1.msra.mxu0 0.0
  %546 = vmatprep.subr.mxu0 0.0
  %547 = vmatpush1.msra.mxu0 0.0
  %548 = vmatprep.subr.mxu0 0.0
  %549 = vmatpush1.msra.mxu0 0.0
  %550 = vmatprep.subr.mxu0 0.0
  %551 = vmatpush1.msra.mxu0 %v512
  %552 = vmatprep.subr.mxu0 0.0
  %553 = vmatpush1.msra.mxu0 %v511
  %554 = vmatprep.subr.mxu0 0.0
  %555 = vmatpush2.msra.mxu0 0.0
  %556 = vmatprep.subr.mxu0 0.0
  %557 = vmatpush2.msra.mxu0 0.0
  %558 = vmatprep.subr.mxu0 0.0
  %559 = vmatpush2.msra.mxu0 0.0
  %560 = vmatprep.subr.mxu0 0.0
  %561 = vmatpush2.msra.mxu0 0.0
  %562 = vmatprep.subr.mxu0 0.0
  %563 = vmatpush2.msra.mxu0 0.0
  %564 = vmatprep.subr.mxu0 0.0
  %565 = vmatpush2.msra.mxu0 0.0
  %566 = vmatprep.subr.mxu0 0.0
  %567 = vmatpush2.msra.mxu0 0.0
  %568 = vmatprep.subr.mxu0 0.0
  %569 = vmatpush2.msra.mxu0 0.0
  %570 = vmatprep.subr.mxu0 0.0
  %571 = vmatpush2.msra.mxu0 0.0
  %572 = vmatprep.subr.mxu0 0.0
  %573 = vmatpush2.msra.mxu0 0.0
  %574 = vmatprep.subr.mxu0 0.0
  %575 = vmatpush2.msra.mxu0 0.0
  %576 = vmatprep.subr.mxu0 0.0
  %577 = vmatpush2.msra.mxu0 0.0
  %578 = vmatprep.subr.mxu0 0.0
  %579 = vmatpush2.msra.mxu0 0.0
  %580 = vmatprep.subr.mxu0 0.0
  %581 = vmatpush2.msra.mxu0 0.0
  %582 = vmatprep.subr.mxu0 0.0
  %583 = vmatpush2.msra.mxu0 0.0
  %584 = vmatprep.subr.mxu0 0.0
  %585 = vmatpush2.msra.mxu0 0.0
  %586 = vmatprep.mubr.f32.mxu0 0.0
  %587 = vmatmul.mubr.f32.gmra.mxu0 %v517
  %v588 = vpop.f32.mrf.mxu0
  %v589 = vadd.f32 0.0, %v588
  %v590 = vpop.f32.mrf.mxu0
  %591 = vmatprep.mubr.f32.mxu0 0.0
  %592 = vmatmul.mubr.f32.gmra.mxu0 %v520
  %v593 = vpop.f32.mrf.mxu0
  %v594 = vadd.f32 0.0, %v593
  %v595 = vpop.f32.mrf.mxu0
  %596 = vdwg.mxu0
  %v597 = vxor.u32 %v589, 2147483648
  %v598 = vxor.u32 %v594, 2147483648
  %v599 = vmul.f32 %v597, 1.442695
  %v600 = vpow.pop %v599
  %v601 = vmul.f32 %v598, 1.442695
  %v602 = vpow.pop %v601
  %v603 = vadd.f32 %v600, 1.0
  %v604 = vadd.f32 %v602, 1.0
  %v605 = vrcp.pop %v603
  %v606 = vmul.f32 1.0, %v605
  %v607 = vrcp.pop %v604
  %v608 = vmul.f32 1.0, %v607
  %vm609 = vcmask 15360
  %610 = vst.msk [vmem:[%s6] sm:$0xff] %vm609, %v606
  %vm611 = vcmask 11264
  %612 = vst.msk [vmem:[%s6 + $0x8] sm:$0xf] %vm611, %v608
  // Predicated region
  $region26: #{tpu_custom_call.1} parent=0 // pred_check
    _
  $region27: #{tpu_custom_call.1} parent=0 // pred_check_branch
    %614 = sbr.rel (0) target = $region29
  $region28: #{tpu_custom_call.1} parent=0 // pred_region
    _
  $region29: #{tpu_custom_call.1} parent=0 // pred_fallthru
    _
  // Predicated region
  $region30: #{tpu_custom_call.1} parent=0 // pred_check
    _
  $region31: #{tpu_custom_call.1} parent=0 // pred_check_branch
    %616 = sbr.rel (0) target = $region33
  $region32: #{tpu_custom_call.1} parent=0 // pred_region
    _
  $region33: #{tpu_custom_call.1} parent=0 // pred_fallthru
    _

</llo_original>
